<compile_context>
chip_gen: v5e
topology: v5e:2x2
jax: 0.10.0
libtpu: 0.0.40
codegen_flags: <defaults>
</compile_context>

<pallas_src>
import math

import jax
import jax.numpy as jnp
from jax.experimental import pallas as pl
from jax.experimental.pallas import tpu as pltpu


def _build_pe_table(d_model: int, max_len: int) -> jnp.ndarray:
    """PyTorch-faithful sin/cos buffer, shape (max_len, 1, d_model). Reference only."""
    position = jnp.arange(max_len, dtype=jnp.float32)[:, None]
    div_term = jnp.exp(
        jnp.arange(0, d_model, 2, dtype=jnp.float32) * (-math.log(10000.0) / d_model)
    )
    pe = jnp.zeros((max_len, d_model), dtype=jnp.float32)
    pe = pe.at[:, 0::2].set(jnp.sin(position * div_term))
    pe = pe.at[:, 1::2].set(jnp.cos(position * div_term))
    return pe[:, None, :]


def _pe_add_kernel(w_ref, x_ref, o_ref):
    """w_ref: (1, D) f32 frequencies (div_term repeated per column pair).
    x_ref / o_ref: (tile_s, B*D) blocks of the (S, B*D)-flattened input.

    pe is computed once per sequence position at (tile_s, D): sin on even
    columns, direct cos on odd columns (PyTorch-accurate even for positions
    near max_len), then lane-tiled across the batch before the add.  sin/cos
    are free slack for this HBM-bandwidth-bound add.
    """
    tile_s, bd = x_ref.shape
    d = w_ref.shape[1]
    b = bd // d

    # Per-row sequence positions, generated in-kernel (no lane-sparse pos stream).
    row0 = pl.program_id(0) * tile_s
    pos = (row0 + jax.lax.broadcasted_iota(jnp.int32, (tile_s, 1), 0)).astype(jnp.float32)

    angle = pos * w_ref[...]                                            # (tile_s, D)
    even_col = jax.lax.broadcasted_iota(jnp.int32, (tile_s, d), 1) % 2 == 0
    pe = jnp.where(even_col, jnp.sin(angle), jnp.cos(angle))            # (tile_s, D) f32

    if b > 1:                                                           # lane-tile over batch
        pe = jnp.concatenate([pe] * b, axis=-1)                         # (tile_s, B*D)

    # f32 accumulation then cast back (matches PyTorch's promote-to-f32 add);
    # for f32 inputs the casts are no-ops.
    o_ref[...] = (x_ref[...].astype(jnp.float32) + pe).astype(o_ref.dtype)


def _num_tensorcores() -> int:
    """Best-effort TensorCores-per-chip (2 on megacore chips: v4 / v5p / v7x)."""
    try:
        info = pltpu.get_tpu_info()
        for attr in ("num_cores", "num_tensorcores", "tensorcores_per_chip", "cores_per_chip"):
            v = getattr(info, attr, None)
            if isinstance(v, int) and 0 < v <= 8:
                return v
    except Exception:
        pass
    try:
        kind = jax.devices()[0].device_kind.lower()
        if any(t in kind for t in ("v7", "v5p", "v4")):
            return 2
    except Exception:
        pass
    return 1


def _choose_tile_s(seq_len, row_bytes, sublane_align, *,
                   target_block_bytes, min_grid_steps, want_even_grid):
    """Rows per block: ~target_block_bytes, sublane-aligned, >= min_grid_steps
    grid steps (so multi-TC chips get work), optionally an even step count."""
    def cdiv(a, b):
        return -(-a // b)

    rows = max(sublane_align, target_block_bytes // max(1, row_bytes))
    rows = min(rows, seq_len)
    rows = min(rows, max(sublane_align, cdiv(seq_len, min_grid_steps)))
    if rows >= seq_len:
        return seq_len                               # tiny input: single full-extent block
    rows = max(sublane_align, (rows // sublane_align) * sublane_align)
    if want_even_grid:                               # avoid 1-block tail imbalance on 2-TC chips
        steps = cdiv(seq_len, rows)
        if steps > 1 and steps % 2 == 1:
            alt = cdiv(cdiv(seq_len, steps + 1), sublane_align) * sublane_align
            if alt >= sublane_align and cdiv(seq_len, alt) % 2 == 0:
                rows = alt
    return min(rows, seq_len)


def positional_encoding_forward(
    x: jnp.ndarray,
    *,
    target_block_bytes: int = 4 << 20,      # ~4 MiB x-block -> ~17 MiB double-buffered working set
    donate_x: bool = False,
) -> jnp.ndarray:
    """x: (S, B, D). Returns x + pe[:S] with the PyTorch sin/cos encoding."""
    S, B, D = x.shape
    assert D % 2 == 0, "d_model must be even (same implicit requirement as the PyTorch module)"
    itemsize = jnp.dtype(x.dtype).itemsize

    # Tiny per-column frequency table: w[2i] = w[2i+1] = div_term[i].
    div_term = jnp.exp(jnp.arange(0, D, 2, dtype=jnp.float32) * (-math.log(10000.0) / D))
    w = jnp.repeat(div_term, 2).reshape(1, D)

    # Lane-dense view: D stays fastest-varying, batch folds into the lane dim.
    x_flat = x.reshape(S, B * D)             # free reshape: row-major layout unchanged
    row_bytes = B * D * itemsize

    num_tc = _num_tensorcores()
    sublane_align = max(8, 32 // itemsize)   # 8 for f32, 16 for bf16, 32 for int8/fp8
    min_grid_steps = 8 if num_tc >= 2 else 2
    tile_s = _choose_tile_s(
        S, row_bytes, sublane_align,
        target_block_bytes=target_block_bytes,
        min_grid_steps=min_grid_steps,
        want_even_grid=(num_tc >= 2),
    )
    grid = (pl.cdiv(S, tile_s),)

    # Explicit scoped-VMEM budget: double-buffered x + out blocks + tiny table + slack.
    blk = tile_s * B * D * itemsize
    vmem_needed = 2 * (2 * blk) + 2 * D * 4 + (2 << 20)
    vmem_limit = int(min(max(vmem_needed, 8 << 20), 32 << 20))   # safe on v5e/v6e/v7x

    out_flat = pl.pallas_call(
        _pe_add_kernel,
        out_shape=jax.ShapeDtypeStruct((S, B * D), x.dtype),
        grid=grid,
        in_specs=[
            pl.BlockSpec((1, D), lambda i: (0, 0)),             # frequency table (tiny, constant)
            pl.BlockSpec((tile_s, B * D), lambda i: (i, 0)),    # x block
        ],
        out_specs=pl.BlockSpec((tile_s, B * D), lambda i: (i, 0)),
        compiler_params=pltpu.CompilerParams(
            dimension_semantics=("parallel",),
            vmem_limit_bytes=vmem_limit,
        ),
        input_output_aliases=({1: 0} if donate_x else {}),
    )(w, x_flat)

    return out_flat.reshape(S, B, D)


if __name__ == "__main__":
    d_model = 32
    batch = 2
    max_len = 64       # small synthetic max_len (module default is 5000)

    key = jax.random.PRNGKey(0)
    pe = _build_pe_table(d_model, max_len)

    # seq_len=8: single full block; seq_len=9: non-aligned length; seq_len=40
    # with a tiny block target: multi-block grid + partial (padded) tail block.
    for seq_len, blk_bytes in ((8, 4 << 20), (9, 4 << 20), (40, 4096)):
        key, sub = jax.random.split(key)
        x = jax.random.normal(sub, (seq_len, batch, d_model), dtype=jnp.float32)

        ref = x + pe[:seq_len, :]                      # PyTorch-faithful reference
        out = jax.block_until_ready(
            positional_encoding_forward(x, target_block_bytes=blk_bytes)
        )

        assert out.shape == (seq_len, batch, d_model)
        assert jnp.allclose(out, ref, atol=1e-5), f"mismatch vs reference (S={seq_len})"

    print("KERNEL_OK")
</pallas_src>

<mosaic_0001>
module attributes {stable_mosaic.version = 11 : i64} {
  func.func @_pe_add_kernel(%arg0: i32, %arg1: memref<1x32xf32, #tpu.memory_space<vmem>>, %arg2: memref<8x64xf32, #tpu.memory_space<vmem>>, %arg3: memref<8x64xf32, #tpu.memory_space<vmem>>) attributes {dimension_semantics = [#tpu.dimension_semantics<parallel>], iteration_bounds = array<i64: 1>, scalar_prefetch = 0 : i64, scratch_operands = 0 : i64, tpu.core_type = #tpu.core_type<tc>, window_params = [{pipeline_mode = #tpu.pipeline_mode<synchronous>, transform_indices = @transform_0, window_bounds = array<i64: 1, 32>}, {transform_indices = @transform_1, window_bounds = array<i64: 8, 64>}, {transform_indices = @transform_2, window_bounds = array<i64: 8, 64>}]} {
    %c8_i32 = arith.constant 8 : i32
    %0 = arith.muli %arg0, %c8_i32 : i32
    %1 = tpu.iota {dimensions = array<i32: 0>} : vector<8x1xi32>
    %2 = vector.broadcast %0 : i32 to vector<8x1xi32>
    %3 = arith.addi %2, %1 : vector<8x1xi32>
    %4 = arith.sitofp %3 : vector<8x1xi32> to vector<8x1xf32>
    %c0 = arith.constant 0 : index
    %c0_0 = arith.constant 0 : index
    %5 = vector.load %arg1[%c0, %c0_0] : memref<1x32xf32, #tpu.memory_space<vmem>>, vector<1x32xf32>
    %6 = vector.broadcast %4 : vector<8x1xf32> to vector<8x32xf32>
    %7 = vector.broadcast %5 : vector<1x32xf32> to vector<8x32xf32>
    %8 = arith.mulf %6, %7 : vector<8x32xf32>
    %9 = tpu.iota {dimensions = array<i32: 1>} : vector<8x32xi32>
    %c2_i32 = arith.constant 2 : i32
    %c0_i32 = arith.constant 0 : i32
    %10 = arith.cmpi eq, %c2_i32, %c0_i32 : i32
    %c1_i32 = arith.constant 1 : i32
    %11 = arith.select %10, %c1_i32, %c2_i32 : i32
    %12 = vector.broadcast %11 : i32 to vector<8x32xi32>
    %13 = arith.remsi %9, %12 : vector<8x32xi32>
    %c0_i32_1 = arith.constant 0 : i32
    %14 = vector.broadcast %c0_i32_1 : i32 to vector<8x32xi32>
    %15 = arith.cmpi ne, %13, %14 : vector<8x32xi32>
    %c0_i32_2 = arith.constant 0 : i32
    %16 = vector.broadcast %c0_i32_2 : i32 to vector<8x32xi32>
    %17 = arith.cmpi slt, %13, %16 : vector<8x32xi32>
    %c0_i32_3 = arith.constant 0 : i32
    %18 = arith.cmpi slt, %11, %c0_i32_3 : i32
    %19 = vector.broadcast %18 : i1 to vector<8x32xi1>
    %20 = vector.broadcast %19 : vector<8x32xi1> to vector<8x32xi1>
    %21 = arith.xori %17, %20 : vector<8x32xi1>
    %22 = arith.andi %21, %15 : vector<8x32xi1>
    %23 = vector.broadcast %11 : i32 to vector<8x32xi32>
    %24 = arith.addi %13, %23 : vector<8x32xi32>
    %25 = arith.select %22, %24, %13 : vector<8x32xi1>, vector<8x32xi32>
    %c0_i32_4 = arith.constant 0 : i32
    %26 = vector.broadcast %c0_i32_4 : i32 to vector<8x32xi32>
    %27 = arith.cmpi eq, %25, %26 : vector<8x32xi32>
    %28 = math.sin %8 : vector<8x32xf32>
    %29 = math.cos %8 : vector<8x32xf32>
    %30 = arith.select %27, %28, %29 : vector<8x32xi1>, vector<8x32xf32>
    %31 = tpu.concatenate %30, %30 in 1 : vector<8x32xf32>, vector<8x32xf32> -> vector<8x64xf32>
    %c0_5 = arith.constant 0 : index
    %c0_6 = arith.constant 0 : index
    %32 = vector.load %arg2[%c0_5, %c0_6] : memref<8x64xf32, #tpu.memory_space<vmem>>, vector<8x64xf32>
    %33 = arith.addf %32, %31 : vector<8x64xf32>
    %c0_7 = arith.constant 0 : index
    %c0_8 = arith.constant 0 : index
    %34 = vector.load %arg3[%c0_7, %c0_8] : memref<8x64xf32, #tpu.memory_space<vmem>>, vector<8x64xf32>
    tpu.vector_store %arg3[%c0_7, %c0_8], %33 {strides = array<i32>} : memref<8x64xf32, #tpu.memory_space<vmem>>, vector<8x64xf32>,
    return
  }
  func.func @transform_0(%arg0: i32) -> (i32, i32) {
    %c0_i32 = arith.constant 0 : i32
    %c0_i32_0 = arith.constant 0 : i32
    %c0_i32_1 = arith.constant 0 : i32
    return %c0_i32, %c0_i32_0 : i32, i32
  }
  func.func @transform_1(%arg0: i32) -> (i32, i32) {
    %c0_i32 = arith.constant 0 : i32
    %c0_i32_0 = arith.constant 0 : i32
    return %arg0, %c0_i32 : i32, i32
  }
  func.func @transform_2(%arg0: i32) -> (i32, i32) {
    %c0_i32 = arith.constant 0 : i32
    %c0_i32_0 = arith.constant 0 : i32
    return %arg0, %c0_i32 : i32, i32
  }
}

</mosaic_0001>

<llo_original>
// kernel: tpu_custom_call.1
$region0: #{tpu_custom_call.1}
  #allocation0 [shape = 'u32[]', space=smem, size = 0x4, offset = 0x4, fixed_abs, tag = 'smem constant byte address 0x4 - core index']
  #allocation1 [shape = 'u32[72,128]{1,0:T(1,128)}', space=vmem, size = 0x9000, scoped, tag = 'internal scratch']
  %s0 = inlined_call_operand.hbm [shape: f32[1,32], index: 0, kind: input, shape index: {}]
  %s1 = inlined_call_operand.hbm [shape: f32[8,64], index: 1, kind: input, shape index: {}]
  %s2 = inlined_call_operand.hbm [shape: f32[8,64], index: 2, kind: output, shape index: {}]
  %s3 = sld [smem:[#allocation0]]
  $region26: #{tpu_custom_call.1} parent=0
    _
  %s5 = ssub.s32 1, %s3
  %s6 = scalar_select 0, %s5, %s3
  $region1: #{tpu_custom_call.1} parent=0
    #allocation2 [shape = 'u8[512]{0}', space=vmem, size = 0x400, scoped, tag = 'input window, operand 0, single buffered']
    #allocation3 [shape = 's32[1]{0}', space=sflag, size = 0x4, scoped, tag = 'scoped memory for tpu_custom_call.1']
    #allocation4 [shape = 's32[1]{0}', space=sflag, size = 0x4, scoped, tag = 'scoped memory for tpu_custom_call.1']
    #allocation5 [shape = 'u8[4096]{0}', space=vmem, size = 0x1000, scoped, tag = 'input window, operand 1, single buffered']
    #allocation6 [shape = 's32[1]{0}', space=sflag, size = 0x4, scoped, tag = 'scoped memory for tpu_custom_call.1']
    #allocation7 [shape = 'u8[4096]{0}', space=vmem, size = 0x1000, scoped, tag = 'output window, operand 0, single buffered']
    %7 = vsyncpa [#allocation3], 0
    %8 = vsyncpa [#allocation6], 0
    %9 = vsyncpa [#allocation4], 0
    // Predicated region
    $region2: #{tpu_custom_call.1} parent=1 // pred_check
      _
    $region3: #{tpu_custom_call.1} parent=1 // pred_check_branch
      %11 = sbr.rel (0) target = $region5
    $region4: #{tpu_custom_call.1} parent=1 // pred_region
      %13 = vsyncadd [#allocation3], 0
      %s15 = sshll.u32 %s0, 4
      %s16 = int_to_ptr.hbm [resolvable:$true] %s15
      %s17 = sshll.u32 [#allocation2], 4
      %s18 = int_to_ptr.vmem [resolvable:$true] %s17
      %20 = dma.hbm_to_vmem [thread:$0]  %s16, 16, %s18, [#allocation3]
    $region5: #{tpu_custom_call.1} parent=1 // pred_fallthru
      _
    // Predicated region
    $region6: #{tpu_custom_call.1} parent=1 // pred_check
      _
    $region7: #{tpu_custom_call.1} parent=1 // pred_check_branch
      %22 = sbr.rel (0) target = $region9
    $region8: #{tpu_custom_call.1} parent=1 // pred_region
      %24 = vsyncadd [#allocation6], 0
      %s26 = sshll.u32 %s1, 4
      %s27 = int_to_ptr.hbm [resolvable:$true] %s26
      %s28 = sshll.u32 [#allocation5], 4
      %s29 = int_to_ptr.vmem [resolvable:$true] %s28
      %31 = dma.hbm_to_vmem [thread:$0]  %s27, 128, %s29, [#allocation6]
    $region9: #{tpu_custom_call.1} parent=1 // pred_fallthru
      _
    // Predicated region
    $region10: #{tpu_custom_call.1} parent=1 // pred_check
      _
    $region11: #{tpu_custom_call.1} parent=1 // pred_check_branch
      %33 = sbr.rel (0) target = $region13
    $region12: #{tpu_custom_call.1} parent=1 // pred_region
      %35 = dma.done [#allocation3], 16
    $region13: #{tpu_custom_call.1} parent=1 // pred_fallthru
      _
    // Predicated region
    $region14: #{tpu_custom_call.1} parent=1 // pred_check
      _
    $region15: #{tpu_custom_call.1} parent=1 // pred_check_branch
      %37 = sbr.rel (0) target = $region17
    $region16: #{tpu_custom_call.1} parent=1 // pred_region
      %39 = dma.done [#allocation6], 128
    $region17: #{tpu_custom_call.1} parent=1 // pred_fallthru
      _
    %s40 = smul.u32 0, 8
    %v41 = vlaneseq
    %v42 = vshrl.u32 %v41, 7
    %v43 = vstv %s40
    %v44 = vadd.s32 %v43, %v42
    %v45 = vcvt.s32.f32 %v44
    %v46 = vld [vmem:[#allocation2] sm:$0x1]
    %v48 = vperm.slane %v46, 0
    %v50 = vmul.f32 %v45, %v48
    %v51 = vlaneseq
    %v52 = vand.u32 %v51, 127
    %vm53 = vcmp.lt.s32.totalorder %v52, 0
    %v54 = vsub.s32 0, %v52
    %v55 = vsel %vm53, %v54, %v52
    %v56 = vshrl.u32 %v55, 1
    %v57 = vand.u32 %v55, 1
    %v58 = vsub.s32 0, %v57
    %v59 = vsel %vm53, %v58, %v57
    %vm60 = vcmp.ne.s32.totalorder %v59, 0
    %vm61 = vcmp.lt.s32.totalorder %v59, 0
    %vm62 = vmand %vm61, %vm60
    %v63 = vadd.s32 %v59, 2
    %v64 = vsel %vm62, %v63, %v59
    %vm65 = vcmp.eq.s32.totalorder %v64, 0
    %v66 = vand.u32 2147483647, %v50
    %vm67 = vcmp.le.f32.partialorder %v66, 0.7853982
    %vm68 = vcmp.lt.s32.totalorder %v50, 0
    %v69 = vand.u32 %v50, 2139095040
    %v70 = vshrl.u32 %v69, 23
    %v71 = vsub.s32 %v70, 127
    %v72 = vand.u32 2147483647, %v50
    %v73 = vand.u32 %v72, 8388607
    %v74 = vor.u32 %v73, 8388608
    %v75 = vsub.s32 0, %v74
    %v76 = vadd.s32 %v71, 1
    %vm77 = vcmp.gt.s32.totalorder %v76, 0
    %v78 = vsel %vm77, %v76, 0
    %v79 = vshrl.u32 %v78, 5
    %v80 = vand.u32 %v78, 31
    %v81 = vsub.s32 32, %v80
    %v82 = vshrl.u32 683565275, %v81
    %v83 = vshll.u32 683565275, %v80
    %v84 = vshrl.u32 2475754826, %v81
    %v85 = vor.u32 %v83, %v84
    %v86 = vshll.u32 2475754826, %v80
    %v87 = vshrl.u32 2131351028, %v81
    %v88 = vor.u32 %v86, %v87
    %v89 = vshll.u32 2131351028, %v80
    %v90 = vshrl.u32 2102212464, %v81
    %v91 = vor.u32 %v89, %v90
    %v92 = vshll.u32 2102212464, %v80
    %v93 = vshrl.u32 920167782, %v81
    %v94 = vor.u32 %v92, %v93
    %v95 = vshll.u32 920167782, %v80
    %v96 = vshrl.u32 1326507024, %v81
    %v97 = vor.u32 %v95, %v96
    %vm98 = vcmp.lt.s32.totalorder %v79, 1
    %vm99 = vcmp.lt.s32.totalorder %v79, 2
    %vm100 = vcmp.lt.s32.totalorder %v79, 3
    %vm101 = vcmp.lt.s32.totalorder %v79, 4
    %v102 = vsel %vm98, %v82, %v85
    %v103 = vsel %vm101, %v91, 2102212464
    %v104 = vsel %vm100, %v88, %v103
    %v105 = vsel %vm99, %v102, %v104
    %v106 = vsel %vm98, %v85, %v88
    %v107 = vsel %vm101, %v94, 920167782
    %v108 = vsel %vm100, %v91, %v107
    %v109 = vsel %vm99, %v106, %v108
    %v110 = vsel %vm98, %v88, %v91
    %v111 = vsel %vm101, %v97, 1326507024
    %v112 = vsel %vm100, %v94, %v111
    %v113 = vsel %vm99, %v110, %v112
    %v114 = vshll.u32 %v74, 8
    %v115 = vand.u32 %v114, 65535
    %v116 = vshrl.u32 %v114, 16
    %v117 = vand.u32 %v113, 65535
    %v118 = vshrl.u32 %v113, 16
    %v119 = vmul.u32 %v115, %v117
    %v120 = vmul.u32 %v115, %v118
    %v121 = vmul.u32 %v116, %v117
    %v122 = vmul.u32 %v116, %v118
    %v123 = vshll.u32 %v120, 16
    %v124 = vshrl.u32 %v120, 16
    %v125 = vshll.u32 %v121, 16
    %v126 = vshrl.u32 %v121, 16
    %vm127 = vc.u32 %v119, %v123
    %v128 = vsel %vm127, 1, 0
    %v129 = vadd.s32 %v119, %v123
    %v130 = vadd.s32 %v122, %v128
    %vm131 = vc.u32 %v129, %v125
    %v132 = vsel %vm131, 1, 0
    %v133 = vadd.s32 %v129, %v125
    %v134 = vadd.s32 %v130, %v132
    %v135 = vadd.s32 %v134, %v124
    %v136 = vadd.s32 %v135, %v126
    %v137 = vand.u32 %v114, 65535
    %v138 = vshrl.u32 %v114, 16
    %v139 = vand.u32 %v109, 65535
    %v140 = vshrl.u32 %v109, 16
    %v141 = vmul.u32 %v137, %v139
    %v142 = vmul.u32 %v137, %v140
    %v143 = vmul.u32 %v138, %v139
    %v144 = vmul.u32 %v138, %v140
    %v145 = vshll.u32 %v142, 16
    %v146 = vshrl.u32 %v142, 16
    %v147 = vshll.u32 %v143, 16
    %v148 = vshrl.u32 %v143, 16
    %vm149 = vc.u32 %v141, %v145
    %v150 = vsel %vm149, 1, 0
    %v151 = vadd.s32 %v141, %v145
    %v152 = vadd.s32 %v144, %v150
    %vm153 = vc.u32 %v151, %v147
    %v154 = vsel %vm153, 1, 0
    %v155 = vadd.s32 %v151, %v147
    %v156 = vadd.s32 %v152, %v154
    %v157 = vadd.s32 %v156, %v146
    %v158 = vadd.s32 %v157, %v148
    %v159 = vmul.u32 %v114, %v105
    %v160 = vadd.s32 %v136, %v155
    %vm161 = vc.u32 %v136, %v155
    %v162 = vadd.s32 %v158, 1
    %v163 = vsel %vm161, %v162, %v158
    %v164 = vadd.s32 %v159, %v163
    %v165 = vadd.s32 %v164, 536870912
    %v166 = vshrl.u32 %v165, 30
    %v167 = vshll.u32 %v166, 30
    %v168 = vsub.s32 %v164, %v167
    %vm169 = vcmp.lt.s32.totalorder %v168, 0
    %v170 = vsub.s32 0, %v168
    %v171 = vsel %vm169, %v170, %v168
    %v172 = vclz %v171
    %v173 = vsub.s32 %v172, 2
    %vm174 = vcmp.gt.s32.totalorder 0, %v173
    %v175 = vsel %vm174, 0, %v173
    %v176 = vsub.s32 32, %v175
    %v177 = vshll.u32 %v168, %v175
    %v178 = vshrl.u32 %v160, %v176
    %v179 = vor.u32 %v177, %v178
    %v180 = vsub.s32 4294967266, %v175
    %v181 = vadd.s32 %v180, 127
    %v182 = vshll.u32 %v181, 23
    %v183 = vor.u32 4788187, %v182
    %v184 = vand.u32 2147483647, %v183
    %v186 = vcvt.s32.f32 %v179
    %v187 = vmul.f32 %v186, %v184
    %v188 = vxor.u32 %v187, 2147483648
    %v189 = vsel %vm68, %v188, %v187
    %v190 = vsub.s32 4, %v166
    %v191 = vsel %vm68, %v190, %v166
    %v192 = vsel %vm67, %v50, %v189
    %v193 = vsel %vm67, 0, %v191
    %v194 = vmul.f32 %v192, %v192
    %v195 = vmul.f32 %v194, -0.001358992
    %v196 = vadd.f32 %v195, 0.041655596
    %v197 = vmul.f32 %v194, %v196
    %v198 = vadd.f32 %v197, -0.4999988
    %v199 = vmul.f32 %v194, %v198
    %v200 = vadd.f32 1.0, %v199
    %v201 = vmul.f32 %v192, %v192
    %v202 = vmul.f32 %v201, -0.00019511016
    %v203 = vadd.f32 %v202, 0.008332121
    %v204 = vmul.f32 %v201, %v203
    %v205 = vadd.f32 %v204, -0.16666654
    %v206 = vmul.f32 %v201, %v205
    %v207 = vadd.f32 %v206, 1.0
    %v208 = vmul.f32 %v207, %v192
    %vm209 = vweird.f32 %v50
    %v210 = vadd.s32 %v193, 3
    %v211 = vand.u32 %v210, 3
    %vm212 = vcmp.lt.s32.totalorder %v211, 2
    %vm213 = vcmp.eq.s32.totalorder %v211, 0
    %v214 = vxor.u32 %v208, 2147483648
    %v215 = vsel %vm213, %v200, %v214
    %vm216 = vcmp.eq.s32.totalorder %v211, 2
    %v217 = vxor.u32 %v200, 2147483648
    %v218 = vsel %vm216, %v217, %v208
    %v219 = vsel %vm212, %v215, %v218
    %v220 = vsel %vm209, nan, %v219
    %v221 = vand.u32 2147483647, %v50
    %vm222 = vcmp.le.f32.partialorder %v221, 0.7853982
    %vm223 = vcmp.lt.s32.totalorder %v50, 0
    %v224 = vand.u32 %v50, 2139095040
    %v225 = vshrl.u32 %v224, 23
    %v226 = vsub.s32 %v225, 127
    %v227 = vand.u32 2147483647, %v50
    %v228 = vand.u32 %v227, 8388607
    %v229 = vor.u32 %v228, 8388608
    %v230 = vsub.s32 0, %v229
    %v231 = vadd.s32 %v226, 1
    %vm232 = vcmp.gt.s32.totalorder %v231, 0
    %v233 = vsel %vm232, %v231, 0
    %v234 = vshrl.u32 %v233, 5
    %v235 = vand.u32 %v233, 31
    %v236 = vsub.s32 32, %v235
    %v237 = vshrl.u32 683565275, %v236
    %v238 = vshll.u32 683565275, %v235
    %v239 = vshrl.u32 2475754826, %v236
    %v240 = vor.u32 %v238, %v239
    %v241 = vshll.u32 2475754826, %v235
    %v242 = vshrl.u32 2131351028, %v236
    %v243 = vor.u32 %v241, %v242
    %v244 = vshll.u32 2131351028, %v235
    %v245 = vshrl.u32 2102212464, %v236
    %v246 = vor.u32 %v244, %v245
    %v247 = vshll.u32 2102212464, %v235
    %v248 = vshrl.u32 920167782, %v236
    %v249 = vor.u32 %v247, %v248
    %v250 = vshll.u32 920167782, %v235
    %v251 = vshrl.u32 1326507024, %v236
    %v252 = vor.u32 %v250, %v251
    %vm253 = vcmp.lt.s32.totalorder %v234, 1
    %vm254 = vcmp.lt.s32.totalorder %v234, 2
    %vm255 = vcmp.lt.s32.totalorder %v234, 3
    %vm256 = vcmp.lt.s32.totalorder %v234, 4
    %v257 = vsel %vm253, %v237, %v240
    %v258 = vsel %vm256, %v246, 2102212464
    %v259 = vsel %vm255, %v243, %v258
    %v260 = vsel %vm254, %v257, %v259
    %v261 = vsel %vm253, %v240, %v243
    %v262 = vsel %vm256, %v249, 920167782
    %v263 = vsel %vm255, %v246, %v262
    %v264 = vsel %vm254, %v261, %v263
    %v265 = vsel %vm253, %v243, %v246
    %v266 = vsel %vm256, %v252, 1326507024
    %v267 = vsel %vm255, %v249, %v266
    %v268 = vsel %vm254, %v265, %v267
    %v269 = vshll.u32 %v229, 8
    %v270 = vand.u32 %v269, 65535
    %v271 = vshrl.u32 %v269, 16
    %v272 = vand.u32 %v268, 65535
    %v273 = vshrl.u32 %v268, 16
    %v274 = vmul.u32 %v270, %v272
    %v275 = vmul.u32 %v270, %v273
    %v276 = vmul.u32 %v271, %v272
    %v277 = vmul.u32 %v271, %v273
    %v278 = vshll.u32 %v275, 16
    %v279 = vshrl.u32 %v275, 16
    %v280 = vshll.u32 %v276, 16
    %v281 = vshrl.u32 %v276, 16
    %vm282 = vc.u32 %v274, %v278
    %v283 = vsel %vm282, 1, 0
    %v284 = vadd.s32 %v274, %v278
    %v285 = vadd.s32 %v277, %v283
    %vm286 = vc.u32 %v284, %v280
    %v287 = vsel %vm286, 1, 0
    %v288 = vadd.s32 %v284, %v280
    %v289 = vadd.s32 %v285, %v287
    %v290 = vadd.s32 %v289, %v279
    %v291 = vadd.s32 %v290, %v281
    %v292 = vand.u32 %v269, 65535
    %v293 = vshrl.u32 %v269, 16
    %v294 = vand.u32 %v264, 65535
    %v295 = vshrl.u32 %v264, 16
    %v296 = vmul.u32 %v292, %v294
    %v297 = vmul.u32 %v292, %v295
    %v298 = vmul.u32 %v293, %v294
    %v299 = vmul.u32 %v293, %v295
    %v300 = vshll.u32 %v297, 16
    %v301 = vshrl.u32 %v297, 16
    %v302 = vshll.u32 %v298, 16
    %v303 = vshrl.u32 %v298, 16
    %vm304 = vc.u32 %v296, %v300
    %v305 = vsel %vm304, 1, 0
    %v306 = vadd.s32 %v296, %v300
    %v307 = vadd.s32 %v299, %v305
    %vm308 = vc.u32 %v306, %v302
    %v309 = vsel %vm308, 1, 0
    %v310 = vadd.s32 %v306, %v302
    %v311 = vadd.s32 %v307, %v309
    %v312 = vadd.s32 %v311, %v301
    %v313 = vadd.s32 %v312, %v303
    %v314 = vmul.u32 %v269, %v260
    %v315 = vadd.s32 %v291, %v310
    %vm316 = vc.u32 %v291, %v310
    %v317 = vadd.s32 %v313, 1
    %v318 = vsel %vm316, %v317, %v313
    %v319 = vadd.s32 %v314, %v318
    %v320 = vadd.s32 %v319, 536870912
    %v321 = vshrl.u32 %v320, 30
    %v322 = vshll.u32 %v321, 30
    %v323 = vsub.s32 %v319, %v322
    %vm324 = vcmp.lt.s32.totalorder %v323, 0
    %v325 = vsub.s32 0, %v323
    %v326 = vsel %vm324, %v325, %v323
    %v327 = vclz %v326
    %v328 = vsub.s32 %v327, 2
    %vm329 = vcmp.gt.s32.totalorder 0, %v328
    %v330 = vsel %vm329, 0, %v328
    %v331 = vsub.s32 32, %v330
    %v332 = vshll.u32 %v323, %v330
    %v333 = vshrl.u32 %v315, %v331
    %v334 = vor.u32 %v332, %v333
    %v335 = vsub.s32 4294967266, %v330
    %v336 = vadd.s32 %v335, 127
    %v337 = vshll.u32 %v336, 23
    %v338 = vor.u32 4788187, %v337
    %v339 = vand.u32 2147483647, %v338
    %v341 = vcvt.s32.f32 %v334
    %v342 = vmul.f32 %v341, %v339
    %v343 = vxor.u32 %v342, 2147483648
    %v344 = vsel %vm223, %v343, %v342
    %v345 = vsub.s32 4, %v321
    %v346 = vsel %vm223, %v345, %v321
    %v347 = vsel %vm222, %v50, %v344
    %v348 = vsel %vm222, 0, %v346
    %v349 = vmul.f32 %v347, %v347
    %v350 = vmul.f32 %v349, -0.001358992
    %v351 = vadd.f32 %v350, 0.041655596
    %v352 = vmul.f32 %v349, %v351
    %v353 = vadd.f32 %v352, -0.4999988
    %v354 = vmul.f32 %v349, %v353
    %v355 = vadd.f32 1.0, %v354
    %v356 = vmul.f32 %v347, %v347
    %v357 = vmul.f32 %v356, -0.00019511016
    %v358 = vadd.f32 %v357, 0.008332121
    %v359 = vmul.f32 %v356, %v358
    %v360 = vadd.f32 %v359, -0.16666654
    %v361 = vmul.f32 %v356, %v360
    %v362 = vadd.f32 %v361, 1.0
    %v363 = vmul.f32 %v362, %v347
    %vm364 = vweird.f32 %v50
    %v365 = vand.u32 %v348, 3
    %vm366 = vcmp.lt.s32.totalorder %v365, 2
    %vm367 = vcmp.eq.s32.totalorder %v365, 0
    %v368 = vxor.u32 %v363, 2147483648
    %v369 = vsel %vm367, %v355, %v368
    %vm370 = vcmp.eq.s32.totalorder %v365, 2
    %v371 = vxor.u32 %v355, 2147483648
    %v372 = vsel %vm370, %v371, %v363
    %v373 = vsel %vm366, %v369, %v372
    %v374 = vsel %vm364, nan, %v373
    %v375 = vsel %vm65, %v220, %v374
    %377 = vrot.lane.b32.xlu0 %v375, 32
    %v378 = vpop.permute.xlu0 %377
    %vm380 = vcmask 261120
    %v381 = vsel %vm380, %v375, %v378
    %v382 = vld [vmem:[#allocation5] sm:$0xff]
    %v383 = vadd.f32 %v382, %v381
    %vm384 = vcmask 523264
    %385 = vst.msk [vmem:[#allocation7] sm:$0xff] %vm384, %v383
    // Predicated region
    $region18: #{tpu_custom_call.1} parent=1 // pred_check
      _
    $region19: #{tpu_custom_call.1} parent=1 // pred_check_branch
      %387 = sbr.rel (0) target = $region21
    $region20: #{tpu_custom_call.1} parent=1 // pred_region
      %389 = vsyncadd [#allocation4], 0
      %s391 = sshll.u32 [#allocation7], 4
      %s392 = int_to_ptr.vmem [resolvable:$true] %s391
      %s393 = sshll.u32 %s2, 4
      %s394 = int_to_ptr.hbm [resolvable:$true] %s393
      %396 = dma.vmem_to_hbm [thread:$0]  %s392, 128, %s394, [#allocation4]
    $region21: #{tpu_custom_call.1} parent=1 // pred_fallthru
      _
    // Predicated region
    $region22: #{tpu_custom_call.1} parent=1 // pred_check
      _
    $region23: #{tpu_custom_call.1} parent=1 // pred_check_branch
      %398 = sbr.rel (0) target = $region25
    $region24: #{tpu_custom_call.1} parent=1 // pred_region
      %400 = dma.done [#allocation4], 128
    $region25: #{tpu_custom_call.1} parent=1 // pred_fallthru
      _
    %401 = vsyncpa [#allocation3], 1
    %402 = vsyncpa [#allocation6], 1
    %403 = vsyncpa [#allocation4], 1

</llo_original>
